<compile_context>
chip_gen: v5e
topology: v5e:2x2
jax: 0.10.0
libtpu: 0.0.40
codegen_flags: <defaults>
</compile_context>

<pallas_src>
import functools

import jax
import jax.numpy as jnp
from jax.experimental import pallas as pl
from jax.experimental.pallas import tpu as pltpu


# ----------------------------------------------------------------------------
# Generation-aware VMEM budgeting.
# ----------------------------------------------------------------------------
def _vmem_caps():
    """Returns (vmem_limit_bytes, budget for all double-buffered streams)."""
    cap = 64 << 20                      # conservative default = v7x per-TC VMEM
    try:
        cap = int(pltpu.get_tpu_info().vmem_capacity_bytes)
    except Exception:
        pass                            # keep the conservative default
    vmem_limit = max(32 << 20, min((cap * 3) // 4, 96 << 20))
    return vmem_limit, vmem_limit // 2


def _round_up(n, m):
    return -(-n // m) * m


def _pick_block_rows(r, row_bytes, tile_budget_bytes, max_rows=4096):
    """Rows per block: as large as the per-stream VMEM tile budget allows
    (amortizes the ~0.35us/step overhead), multiple of 8, and capped so the
    row grid has >= 2 steps (lets v7x's 2 TensorCores both work)."""
    if r <= 8:
        return r                                   # full dim is always legal
    br = min(max_rows, max(8, tile_budget_bytes // max(row_bytes, 1)))
    br = max(8, (br // 8) * 8)
    if br >= 512:
        br = (br // 256) * 256                     # MXU/vreg-friendly for big tiles
    half = _round_up(-(-r // 2), 8)                # ensure grid >= 2 when r permits
    return max(8, min(br, half))


# ----------------------------------------------------------------------------
# Cheap counter-based dropout hash (portable: plain VPU integer ops).
# ----------------------------------------------------------------------------
def _keep_mask(idx_u32, seed_u32, thresh16):
    """~Half the VPU ops of a full murmur finalizer; keep-test on 16 bits.
    Keeps the dropout path HBM-bound on v7x (3.2 TB/s) and bf16-on-v6e."""
    h = idx_u32 ^ seed_u32
    h = h * jnp.uint32(0x85EBCA6B)
    h = h ^ (h >> jnp.uint32(15))
    h = h * jnp.uint32(0xC2B2AE35)
    r16 = (h >> jnp.uint32(16)).astype(jnp.int32)  # uniform in [0, 2^16)
    return r16 >= jnp.int32(thresh16)              # drop with prob ~= p
    # TODO(synk): idx wraps mod 2^32; for tensors > ~4.3e9 elements the mask
    # pattern would repeat (correlated dropout) — guard at the wrapper level.


def _mix_seed(seed_ref):
    return (seed_ref[0].astype(jnp.uint32) * jnp.uint32(0x9E3779B9)
            + jnp.uint32(0x7F4A7C15))


# ----------------------------------------------------------------------------
# Fused kernel: LayerNorm -> linear sublayer (MXU) -> dropout -> residual add.
# ----------------------------------------------------------------------------
def _fused_compute(x_ln_ref, x_res_ref, w_ref, b_ref, alpha_ref, bias_ref,
                   seed_ref, o_ref, *, row_block, col_block, eps, d, n_total,
                   p, thresh16):
    # --- LayerNorm prologue (full hidden dim is resident in this block) -----
    x = x_ln_ref[...].astype(jnp.float32)
    mean = jnp.mean(x, axis=-1, keepdims=True)
    diff = x - mean
    var = jnp.sum(diff * diff, axis=-1, keepdims=True) * (1.0 / max(d - 1, 1))
    inv = pl.reciprocal(jnp.sqrt(var) + eps, approx=True)   # EUP slot (free)
    y = alpha_ref[0] * (diff * inv) + bias_ref[0]

    # --- linear sublayer on the MXU ----------------------------------------
    z = jnp.dot(y, w_ref[...], preferred_element_type=jnp.float32)
    z = z + b_ref[...].astype(jnp.float32)                  # (1, tn) broadcast

    # --- dropout epilogue ----------------------------------------------------
    if p >= 1.0:
        z = jnp.zeros_like(z)
    elif p > 0.0:
        rows, cols = z.shape
        row0 = jnp.asarray(row_block * rows).astype(jnp.uint32)
        col0 = jnp.asarray(col_block * cols).astype(jnp.uint32)
        row_ids = jax.lax.broadcasted_iota(jnp.uint32, (rows, cols), 0) + row0
        col_ids = jax.lax.broadcasted_iota(jnp.uint32, (rows, cols), 1) + col0
        idx = row_ids * jnp.uint32(n_total) + col_ids
        keep = _keep_mask(idx, _mix_seed(seed_ref), thresh16)
        z = jnp.where(keep, z * jnp.float32(1.0 / (1.0 - p)), jnp.float32(0.0))

    # --- residual add --------------------------------------------------------
    out = x_res_ref[...].astype(jnp.float32) + z
    o_ref[...] = out.astype(o_ref.dtype)


def _fused_single_kernel(x_ref, w_ref, b_ref, alpha_ref, bias_ref, seed_ref,
                         o_ref, *, eps, d, n_total, p, thresh16):
    # Single N tile: the same x block serves LayerNorm and the residual add.
    _fused_compute(x_ref, x_ref, w_ref, b_ref, alpha_ref, bias_ref, seed_ref,
                   o_ref, row_block=pl.program_id(0), col_block=0, eps=eps,
                   d=d, n_total=n_total, p=p, thresh16=thresh16)


def _fused_tiled_kernel(x_ln_ref, x_res_ref, w_ref, b_ref, alpha_ref, bias_ref,
                        seed_ref, o_ref, *, eps, d, n_total, p, thresh16):
    _fused_compute(x_ln_ref, x_res_ref, w_ref, b_ref, alpha_ref, bias_ref,
                   seed_ref, o_ref, row_block=pl.program_id(0),
                   col_block=pl.program_id(1), eps=eps, d=d, n_total=n_total,
                   p=p, thresh16=thresh16)


def residual_connection_linear_fused(x, w, b_lin, alpha, bias, *, dropout_p,
                                     seed, eps=1e-6, w_slab_budget_bytes=None):
    """out = x + dropout(LayerNorm(x) @ w + b_lin), fully fused (one HBM pass
    over x and out, plus the weight slab).  x: (batch, seq, hidden)."""
    bsz, s, d = x.shape
    dk, n = w.shape
    assert dk == d and n == d, "residual add needs sublayer output dim == hidden"
    r = bsz * s
    x2 = x.reshape(r, d)
    b2 = b_lin.reshape(1, n)
    seed_arr = jnp.asarray([seed], dtype=jnp.int32)
    thresh16 = min(65536, max(0, int(round(float(dropout_p) * 65536))))

    vmem_limit, stream_budget = _vmem_caps()
    ew, ex = w.dtype.itemsize, x.dtype.itemsize

    # Column (N) tiling of the weight slab, multiples of 128 (lane-dense).
    w_budget = (w_slab_budget_bytes if w_slab_budget_bytes is not None
                else stream_budget // 3)
    if 2 * d * n * ew <= w_budget:
        tn = n
    else:
        tn = min(n, max(128, (w_budget // (2 * d * ew)) // 128 * 128))
    n_tiles = -(-n // tn)
    tiled = n_tiles > 1

    # Row (token) tiling from the remaining double-buffered VMEM budget.
    per_row_bytes = (d + tn * (2 if tiled else 1)) * ex
    remaining = max(stream_budget - 2 * d * tn * ew - 2 * tn * ew,
                    16 * per_row_bytes)
    tm = _pick_block_rows(r, per_row_bytes, remaining // 2)

    common = dict(eps=eps, d=d, n_total=n, p=float(dropout_p), thresh16=thresh16)
    smem = pl.BlockSpec(memory_space=pltpu.MemorySpace.SMEM)

    if not tiled:
        kernel = functools.partial(_fused_single_kernel, **common)
        grid = (pl.cdiv(r, tm),)
        in_specs = [
            pl.BlockSpec((tm, d), lambda i: (i, 0)),       # x (LN + residual)
            pl.BlockSpec((d, n), lambda i: (0, 0)),        # W (resident slab)
            pl.BlockSpec((1, n), lambda i: (0, 0)),        # b
            smem, smem, smem,                              # alpha, bias, seed
        ]
        out_specs = pl.BlockSpec((tm, n), lambda i: (i, 0))
        dims = ("parallel",)
        args = (x2, w, b2, alpha, bias, seed_arr)
    else:
        kernel = functools.partial(_fused_tiled_kernel, **common)
        grid = (pl.cdiv(r, tm), n_tiles)                   # j innermost: x block stays resident
        in_specs = [
            pl.BlockSpec((tm, d), lambda i, j: (i, 0)),    # x for LayerNorm
            pl.BlockSpec((tm, tn), lambda i, j: (i, j)),   # x slice for residual
            pl.BlockSpec((d, tn), lambda i, j: (0, j)),    # W column slab
            pl.BlockSpec((1, tn), lambda i, j: (0, j)),    # b slice
            smem, smem, smem,
        ]
        out_specs = pl.BlockSpec((tm, tn), lambda i, j: (i, j))
        dims = ("parallel", "parallel")
        args = (x2, x2, w, b2, alpha, bias, seed_arr)

    out = pl.pallas_call(
        kernel,
        out_shape=jax.ShapeDtypeStruct((r, n), x.dtype),
        grid=grid,
        in_specs=in_specs,
        out_specs=out_specs,
        compiler_params=pltpu.CompilerParams(
            dimension_semantics=dims, vmem_limit_bytes=vmem_limit),
    )(*args)
    return out.reshape(bsz, s, n)
    # TODO(synk): hidden dims not a multiple of 128 (like the D=32 test) leave
    # the output stores masked (vst.msk); pad hidden to 128 at the model level
    # for lane-dense stores.  K (=hidden) is kept whole because LayerNorm needs
    # the full row; for hidden so large that (tm, D) no longer fits VMEM a
    # two-pass LN + K-tiled matmul would be required.


# ----------------------------------------------------------------------------
# Unfused kernels (for arbitrary sublayer callables).
# ----------------------------------------------------------------------------
def _layernorm_kernel(x_ref, alpha_ref, bias_ref, o_ref, *, eps, d):
    x = x_ref[...].astype(jnp.float32)
    mean = jnp.mean(x, axis=-1, keepdims=True)
    diff = x - mean
    var = jnp.sum(diff * diff, axis=-1, keepdims=True) * (1.0 / max(d - 1, 1))
    inv = pl.reciprocal(jnp.sqrt(var) + eps, approx=True)
    o_ref[...] = (alpha_ref[0] * (diff * inv) + bias_ref[0]).astype(o_ref.dtype)


def layer_norm_pallas(x2d, alpha, bias, *, eps=1e-6):
    r, d = x2d.shape
    vmem_limit, stream_budget = _vmem_caps()
    block_rows = _pick_block_rows(r, d * x2d.dtype.itemsize, stream_budget // 4)
    return pl.pallas_call(
        functools.partial(_layernorm_kernel, eps=eps, d=d),
        out_shape=jax.ShapeDtypeStruct((r, d), x2d.dtype),
        grid=(pl.cdiv(r, block_rows),),                    # ragged last block, no pad
        in_specs=[
            pl.BlockSpec((block_rows, d), lambda i: (i, 0)),
            pl.BlockSpec(memory_space=pltpu.MemorySpace.SMEM),   # alpha (1,)
            pl.BlockSpec(memory_space=pltpu.MemorySpace.SMEM),   # bias  (1,)
        ],
        out_specs=pl.BlockSpec((block_rows, d), lambda i: (i, 0)),
        compiler_params=pltpu.CompilerParams(
            dimension_semantics=("parallel",), vmem_limit_bytes=vmem_limit),
    )(x2d, alpha, bias)


def _resid_dropout_kernel(x_ref, z_ref, seed_ref, o_ref, *, p, thresh16, n_cols):
    x = x_ref[...]
    z = z_ref[...]
    if p >= 1.0:                       # static branch: drop everything
        o_ref[...] = x
        return
    if p > 0.0:                        # static branch: p is compile-time constant
        rows, cols = z.shape
        row0 = jnp.asarray(pl.program_id(0) * rows).astype(jnp.uint32)
        row_ids = jax.lax.broadcasted_iota(jnp.uint32, (rows, cols), 0) + row0
        col_ids = jax.lax.broadcasted_iota(jnp.uint32, (rows, cols), 1)
        idx = row_ids * jnp.uint32(n_cols) + col_ids
        keep = _keep_mask(idx, _mix_seed(seed_ref), thresh16)
        scale = jnp.asarray(1.0 / (1.0 - p), dtype=z.dtype)   # native dtype math
        z = jnp.where(keep, z * scale, jnp.asarray(0, dtype=z.dtype))
    o_ref[...] = (x + z).astype(o_ref.dtype)


def residual_dropout_pallas(x, z, *, p, seed):
    """out = x + dropout(z); elementwise, lane-dense flattened view, no padding."""
    assert x.shape == z.shape
    z = z.astype(x.dtype)
    orig_shape = x.shape
    n = x.size
    w = None
    for cand in (4096, 2048, 1024, 512, 256, 128):         # widest width dividing n
        if n % cand == 0:
            w = cand
            break
    if w is None:
        w = orig_shape[-1]                                  # natural row view
    r = n // w
    x2, z2 = x.reshape(r, w), z.reshape(r, w)

    vmem_limit, stream_budget = _vmem_caps()
    block_rows = _pick_block_rows(r, w * x.dtype.itemsize, stream_budget // 6)
    seed_arr = jnp.asarray([seed], dtype=jnp.int32)
    thresh16 = min(65536, max(0, int(round(float(p) * 65536))))

    out = pl.pallas_call(
        functools.partial(_resid_dropout_kernel, p=float(p),
                          thresh16=thresh16, n_cols=w),
        out_shape=jax.ShapeDtypeStruct((r, w), x.dtype),
        grid=(pl.cdiv(r, block_rows),),
        in_specs=[
            pl.BlockSpec((block_rows, w), lambda i: (i, 0)),     # x
            pl.BlockSpec((block_rows, w), lambda i: (i, 0)),     # z
            pl.BlockSpec(memory_space=pltpu.MemorySpace.SMEM),   # seed (1,)
        ],
        out_specs=pl.BlockSpec((block_rows, w), lambda i: (i, 0)),
        compiler_params=pltpu.CompilerParams(
            dimension_semantics=("parallel",), vmem_limit_bytes=vmem_limit),
    )(x2, z2, seed_arr)
    return out.reshape(orig_shape)


def residual_connection(x, sublayer, alpha, bias, *, dropout_p, seed, eps=1e-6):
    """Generic path: x: (batch, seq, hidden); `sublayer` is an arbitrary callable.
    It cannot be traced into the Pallas kernel generically, so it runs as plain
    JAX between the LayerNorm kernel and the dropout+residual kernel.  Use
    residual_connection_linear_fused() for known-linear sublayers."""
    b, s, d = x.shape
    y = layer_norm_pallas(x.reshape(b * s, d), alpha, bias, eps=eps)
    z = sublayer(y.reshape(b, s, d))
    return residual_dropout_pallas(x, z, p=dropout_p, seed=seed)


# ----------------------------------------------------------------------------
# Test.
# ----------------------------------------------------------------------------
if __name__ == "__main__":
    B, S, D = 2, 8, 32
    key = jax.random.PRNGKey(0)
    kx, kw, kx2, kw2 = jax.random.split(key, 4)

    x = jax.random.normal(kx, (B, S, D), dtype=jnp.float32)
    alpha = jnp.ones((1,), dtype=jnp.float32)      # LayerNormalization params
    bias = jnp.zeros((1,), dtype=jnp.float32)
    w = jax.random.normal(kw, (D, D), dtype=jnp.float32) / jnp.sqrt(D)
    b_lin = jnp.zeros((D,), dtype=jnp.float32)

    def ref_forward(xv, wv, bv):
        mean = jnp.mean(xv, axis=-1, keepdims=True)
        diff = xv - mean
        std = jnp.sqrt(jnp.sum(diff * diff, axis=-1, keepdims=True)
                       / (xv.shape[-1] - 1))
        y = alpha[0] * diff / (std + 1e-6) + bias[0]
        return xv + (jnp.einsum("bsd,dn->bsn", y, wv) + bv)

    # Tolerance is loosened slightly because the kernel uses the approximate
    # EUP reciprocal; real bugs would show up as O(0.1 - 1) errors.
    TOL = dict(atol=2e-2, rtol=2e-2)

    # --- fused path (known-linear sublayer), dropout disabled ---------------
    out_fused = residual_connection_linear_fused(
        x, w, b_lin, alpha, bias, dropout_p=0.0, seed=0)
    out_fused = jax.block_until_ready(out_fused)
    ref = ref_forward(x, w, b_lin)
    assert jnp.allclose(out_fused, ref, **TOL), "fused path mismatch vs reference"

    # --- generic path (arbitrary callable sublayer), dropout disabled -------
    sublayer = lambda y: jnp.einsum("bsd,dn->bsn", y, w) + b_lin
    out_gen = residual_connection(x, sublayer, alpha, bias, dropout_p=0.0, seed=0)
    out_gen = jax.block_until_ready(out_gen)
    assert jnp.allclose(out_gen, ref, **TOL), "generic path mismatch vs reference"

    # --- fused path with forced N tiling (exercises the n_tiles > 1 variant) -
    D2 = 256
    x2v = jax.random.normal(kx2, (B, S, D2), dtype=jnp.float32)
    w2 = jax.random.normal(kw2, (D2, D2), dtype=jnp.float32) / jnp.sqrt(D2)
    b2v = jnp.zeros((D2,), dtype=jnp.float32)
    out_t = residual_connection_linear_fused(
        x2v, w2, b2v, alpha, bias, dropout_p=0.0, seed=0,
        w_slab_budget_bytes=2 * D2 * 4 * 128)          # -> tn=128, n_tiles=2
    out_t = jax.block_until_ready(out_t)
    assert jnp.allclose(out_t, ref_forward(x2v, w2, b2v), **TOL), \
        "tiled fused path mismatch vs reference"

    # --- dropout active (training-mode semantics) ----------------------------
    out_drop = residual_connection_linear_fused(
        x, w, b_lin, alpha, bias, dropout_p=0.1, seed=1234)
    out_drop = jax.block_until_ready(out_drop)
    assert out_drop.shape == (B, S, D)
    assert bool(jnp.all(jnp.isfinite(out_drop)))

    out_drop2 = residual_connection(x, sublayer, alpha, bias,
                                    dropout_p=0.1, seed=1234)
    out_drop2 = jax.block_until_ready(out_drop2)
    assert out_drop2.shape == (B, S, D)
    assert bool(jnp.all(jnp.isfinite(out_drop2)))

    print("KERNEL_OK")
</pallas_src>

<mosaic_0001>
module attributes {stable_mosaic.version = 11 : i64} {
  func.func @_fused_single_kernel(%arg0: i32, %arg1: memref<8x32xf32, #tpu.memory_space<vmem>>, %arg2: memref<32x32xf32, #tpu.memory_space<vmem>>, %arg3: memref<1x32xf32, #tpu.memory_space<vmem>>, %arg4: memref<1xf32, #tpu.memory_space<smem>>, %arg5: memref<1xf32, #tpu.memory_space<smem>>, %arg6: memref<1xi32, #tpu.memory_space<smem>>, %arg7: memref<8x32xf32, #tpu.memory_space<vmem>>) attributes {dimension_semantics = [#tpu.dimension_semantics<parallel>], iteration_bounds = array<i64: 2>, scalar_prefetch = 0 : i64, scratch_operands = 0 : i64, tpu.core_type = #tpu.core_type<tc>, window_params = [{transform_indices = @transform_0, window_bounds = array<i64: 8, 32>}, {pipeline_mode = #tpu.pipeline_mode<synchronous>, transform_indices = @transform_1, window_bounds = array<i64: 32, 32>}, {pipeline_mode = #tpu.pipeline_mode<synchronous>, transform_indices = @transform_2, window_bounds = array<i64: 1, 32>}, {transform_indices = @transform_3, window_bounds = array<i64: 1>}, {transform_indices = @transform_4, window_bounds = array<i64: 1>}, {transform_indices = @transform_5, window_bounds = array<i64: 1>}, {transform_indices = @transform_6, window_bounds = array<i64: 8, 32>}]} {
    %c0 = arith.constant 0 : index
    %c0_0 = arith.constant 0 : index
    %0 = vector.load %arg1[%c0, %c0_0] : memref<8x32xf32, #tpu.memory_space<vmem>>, vector<8x32xf32>
    %cst = arith.constant dense<0.000000e+00> : vector<8xf32>
    %1 = vector.multi_reduction <add>, %0, %cst [1] : vector<8x32xf32> to vector<8xf32>
    %2 = vector.shape_cast %1 : vector<8xf32> to vector<8x1xf32>
    %cst_1 = arith.constant 3.200000e+01 : f32
    %3 = vector.broadcast %cst_1 : f32 to vector<8x1xf32>
    %4 = arith.divf %2, %3 : vector<8x1xf32>
    %5 = vector.broadcast %4 : vector<8x1xf32> to vector<8x32xf32>
    %6 = arith.subf %0, %5 : vector<8x32xf32>
    %7 = arith.mulf %6, %6 : vector<8x32xf32>
    %cst_2 = arith.constant dense<0.000000e+00> : vector<8xf32>
    %8 = vector.multi_reduction <add>, %7, %cst_2 [1] : vector<8x32xf32> to vector<8xf32>
    %9 = vector.shape_cast %8 : vector<8xf32> to vector<8x1xf32>
    %cst_3 = arith.constant 0.0322580636 : f32
    %10 = vector.broadcast %cst_3 : f32 to vector<8x1xf32>
    %11 = arith.mulf %9, %10 : vector<8x1xf32>
    %12 = math.sqrt %11 : vector<8x1xf32>
    %cst_4 = arith.constant 9.99999997E-7 : f32
    %13 = vector.broadcast %cst_4 : f32 to vector<8x1xf32>
    %14 = arith.addf %12, %13 : vector<8x1xf32>
    %15 = tpu.reciprocal %14 {approx = true} : vector<8x1xf32> -> vector<8x1xf32>
    %c0_5 = arith.constant 0 : index
    %16 = memref.load %arg4[%c0_5] : memref<1xf32, #tpu.memory_space<smem>>
    %17 = vector.broadcast %15 : vector<8x1xf32> to vector<8x32xf32>
    %18 = arith.mulf %6, %17 : vector<8x32xf32>
    %19 = vector.broadcast %16 : f32 to vector<8x32xf32>
    %20 = arith.mulf %19, %18 : vector<8x32xf32>
    %c0_6 = arith.constant 0 : index
    %21 = memref.load %arg5[%c0_6] : memref<1xf32, #tpu.memory_space<smem>>
    %22 = vector.broadcast %21 : f32 to vector<8x32xf32>
    %23 = arith.addf %20, %22 : vector<8x32xf32>
    %c0_7 = arith.constant 0 : index
    %c0_8 = arith.constant 0 : index
    %24 = vector.load %arg2[%c0_7, %c0_8] : memref<32x32xf32, #tpu.memory_space<vmem>>, vector<32x32xf32>
    %cst_9 = arith.constant dense<0.000000e+00> : vector<8x32xf32>
    %25 = tpu.matmul %23, %24, %cst_9 {dimension_numbers = #tpu.dot_dimension_numbers<[1], [0], [0], [1], [0, 0, 1, 1], [], []>} : vector<8x32xf32>, vector<32x32xf32>, vector<8x32xf32> -> vector<8x32xf32>
    %c0_10 = arith.constant 0 : index
    %c0_11 = arith.constant 0 : index
    %26 = vector.load %arg3[%c0_10, %c0_11] : memref<1x32xf32, #tpu.memory_space<vmem>>, vector<1x32xf32>
    %27 = vector.broadcast %26 : vector<1x32xf32> to vector<8x32xf32>
    %28 = arith.addf %25, %27 : vector<8x32xf32>
    %c0_12 = arith.constant 0 : index
    %c0_13 = arith.constant 0 : index
    %29 = vector.load %arg1[%c0_12, %c0_13] : memref<8x32xf32, #tpu.memory_space<vmem>>, vector<8x32xf32>
    %30 = arith.addf %29, %28 : vector<8x32xf32>
    %c0_14 = arith.constant 0 : index
    %c0_15 = arith.constant 0 : index
    %31 = vector.load %arg7[%c0_14, %c0_15] : memref<8x32xf32, #tpu.memory_space<vmem>>, vector<8x32xf32>
    tpu.vector_store %arg7[%c0_14, %c0_15], %30 {strides = array<i32>} : memref<8x32xf32, #tpu.memory_space<vmem>>, vector<8x32xf32>,
    return
  }
  func.func @transform_0(%arg0: i32) -> (i32, i32) {
    %c0_i32 = arith.constant 0 : i32
    %c0_i32_0 = arith.constant 0 : i32
    return %arg0, %c0_i32 : i32, i32
  }
  func.func @transform_1(%arg0: i32) -> (i32, i32) {
    %c0_i32 = arith.constant 0 : i32
    %c0_i32_0 = arith.constant 0 : i32
    %c0_i32_1 = arith.constant 0 : i32
    return %c0_i32, %c0_i32_0 : i32, i32
  }
  func.func @transform_2(%arg0: i32) -> (i32, i32) {
    %c0_i32 = arith.constant 0 : i32
    %c0_i32_0 = arith.constant 0 : i32
    %c0_i32_1 = arith.constant 0 : i32
    return %c0_i32, %c0_i32_0 : i32, i32
  }
  func.func @transform_3(%arg0: i32) -> i32 {
    %c0_i32 = arith.constant 0 : i32
    %c0_i32_0 = arith.constant 0 : i32
    return %c0_i32 : i32
  }
  func.func @transform_4(%arg0: i32) -> i32 {
    %c0_i32 = arith.constant 0 : i32
    %c0_i32_0 = arith.constant 0 : i32
    return %c0_i32 : i32
  }
  func.func @transform_5(%arg0: i32) -> i32 {
    %c0_i32 = arith.constant 0 : i32
    %c0_i32_0 = arith.constant 0 : i32
    return %c0_i32 : i32
  }
  func.func @transform_6(%arg0: i32) -> (i32, i32) {
    %c0_i32 = arith.constant 0 : i32
    %c0_i32_0 = arith.constant 0 : i32
    return %arg0, %c0_i32 : i32, i32
  }
}

</mosaic_0001>

<llo_original>
// kernel: tpu_custom_call.1
$region0: #{tpu_custom_call.1}
  #allocation0 [shape = 'u32[]', space=smem, size = 0x4, offset = 0x4, fixed_abs, tag = 'smem constant byte address 0x4 - core index']
  #allocation1 [shape = 'u32[72,128]{1,0:T(1,128)}', space=vmem, size = 0x9000, scoped, tag = 'internal scratch']
  #allocation2 [shape = 'f32[1]{0:T(128)S(6)}', space=smem, size = 0x200, scoped, tag = 'scoped memory for tpu_custom_call.1']
  #allocation3 [shape = 'f32[1]{0:T(128)S(6)}', space=smem, size = 0x200, scoped, tag = 'scoped memory for tpu_custom_call.1']
  #allocation4 [shape = 's32[1]{0:T(128)S(6)}', space=smem, size = 0x200, scoped, tag = 'scoped memory for tpu_custom_call.1']
  %s0 = inlined_call_operand.hbm [shape: f32[16,32], index: 0, kind: input, shape index: {}]
  %s1 = inlined_call_operand.hbm [shape: f32[32,32], index: 1, kind: input, shape index: {}]
  %s2 = inlined_call_operand.vmem [shape: f32[1,32], index: 2, kind: input, shape index: {}]
  %s3 = inlined_call_operand.<no memory space> [shape: f32[1], index: 3, kind: input, shape index: {}]
  %s4 = inlined_call_operand.<no memory space> [shape: f32[1], index: 4, kind: input, shape index: {}]
  %s5 = inlined_call_operand.<no memory space> [shape: s32[1], index: 5, kind: input, shape index: {}]
  %s6 = inlined_call_operand.hbm [shape: f32[16,32], index: 6, kind: output, shape index: {}]
  %s7 = sld [smem:[#allocation0]]
  $region65: #{tpu_custom_call.1} parent=0
    _
  %s9 = ssub.s32 1, %s7
  %s10 = scalar_select 0, %s9, %s7
  %11 = sst [smem:[#allocation2]] %s3
  %12 = sst [smem:[#allocation3]] %s4
  %13 = sst [smem:[#allocation4]] %s5
  $region1: #{tpu_custom_call.1} parent=0
    #allocation5 [shape = 'u8[8192]{0}', space=vmem, size = 0x2000, scoped, tag = 'input window, operand 0']
    #allocation6 [shape = 's32[2]{0}', space=sflag, size = 0x8, scoped, tag = 'scoped memory for tpu_custom_call.1']
    #allocation7 [shape = 's32[2]{0}', space=sflag, size = 0x8, scoped, tag = 'scoped memory for tpu_custom_call.1']
    #allocation8 [shape = 'u8[16384]{0}', space=vmem, size = 0x4000, scoped, tag = 'input window, operand 1, single buffered']
    #allocation9 [shape = 's32[1]{0}', space=sflag, size = 0x4, scoped, tag = 'scoped memory for tpu_custom_call.1']
    #allocation10 [shape = 'u8[8192]{0}', space=vmem, size = 0x2000, scoped, tag = 'output window, operand 0']
    %14 = vsyncpa [#allocation6], 0
    %s15 = scalar_lea.sflag [#allocation6], 1
    %16 = vsyncpa %s15, 0
    %17 = vsyncpa [#allocation9], 0
    %18 = vsyncpa [#allocation7], 0
    %s19 = scalar_lea.sflag [#allocation7], 1
    %20 = vsyncpa %s19, 0
    loop: start=0, step=1, limit=4
    $region2: #{tpu_custom_call.1} parent=1 // loop_pre_header
      _
    $region3: #{tpu_custom_call.1} parent=1 // loop_header
      %s22 = sphi 0, %s26
      %p23 = scmp.ge.s32.totalorder %s22, 4
      %s32 = sphi 0, %s34
      %s35 = sphi 0, %s32
      %s36 = sphi 0, %s35
      %s52 = sphi 0, %s36
      %s56 = sphi 0, %s56
      %s58 = sphi 0, %s56
      %s59 = sphi 0, %s58
      %s73 = sphi 0, %s59
      %s77 = sphi 0, %s77
      %s79 = sphi 0, %s77
      %s80 = sphi 0, %s79
      %s94 = sphi 0, %s80
      %s98 = sphi 0, %s98
      %s100 = sphi 0, %s98
      %s101 = sphi 0, %s100
      %s115 = sphi 0, %s101
      %s119 = sphi 0, %s119
      %s121 = sphi 0, %s119
      %s122 = sphi 0, %s121
      %s136 = sphi 0, %s122
      %s140 = sphi 0, %s140
      %s142 = sphi 0, %s140
      %s143 = sphi 0, %s142
      %s157 = sphi 0, %s143
      %s163 = sphi 0, %s165
      %s166 = sphi 0, %s163
      %s167 = sphi 0, %s166
      %s183 = sphi 0, %s167
    $region4: #{tpu_custom_call.1} parent=1 // loop_header_branch
      %25 = sbr.rel (%p23) target = $region8
    $region5: #{tpu_custom_call.1} parent=1 // loop_body
      %s27 = ssub.s32 %s22, 1
      %s28 = ssub.s32 %s22, 2
      %s29 = sadd.s32 %s22, 1
      %s30 = ssub.s32 %s22, %s29
      %p31 = scmp.eq.s32.totalorder %s30, 0
      %s33 = sadd.s32 %s32, 1
      %s34 = scalar_select %p31, %s32, %s33
      %p37 = pneg %p31
      %p38 = scmp.eq.s32.totalorder %s22, 1
      %p39 = por %p37, %p38
      %p40 = scmp.ne.s32.totalorder %s32, %s35
      %p41 = scmp.eq.s32.totalorder %s22, 0
      %p42 = por %p40, %p41
      %p43 = scmp.ne.s32.totalorder %s32, %s35
      %p44 = scmp.eq.s32.totalorder %s27, 1
      %p45 = por %p43, %p44
      %p46 = scmp.ne.s32.totalorder %s35, %s36
      %p47 = scmp.eq.s32.totalorder %s27, 0
      %p48 = por %p46, %p47
      %p49 = scmp.ne.s32.totalorder %s35, %s36
      %p50 = scmp.eq.s32.totalorder %s28, 1
      %p51 = por %p49, %p50
      %p53 = scmp.ne.s32.totalorder %s36, %s52
      %p54 = scmp.eq.s32.totalorder %s28, 0
      %p55 = por %p53, %p54
      %s57 = sadd.s32 %s56, 1
      %p60 = scmp.eq.s32.totalorder %s22, 1
      %p61 = scmp.ne.s32.totalorder %s56, %s58
      %p62 = scmp.eq.s32.totalorder %s22, 0
      %p63 = por %p61, %p62
      %p64 = scmp.ne.s32.totalorder %s56, %s58
      %p65 = scmp.eq.s32.totalorder %s27, 1
      %p66 = por %p64, %p65
      %p67 = scmp.ne.s32.totalorder %s58, %s59
      %p68 = scmp.eq.s32.totalorder %s27, 0
      %p69 = por %p67, %p68
      %p70 = scmp.ne.s32.totalorder %s58, %s59
      %p71 = scmp.eq.s32.totalorder %s28, 1
      %p72 = por %p70, %p71
      %p74 = scmp.ne.s32.totalorder %s59, %s73
      %p75 = scmp.eq.s32.totalorder %s28, 0
      %p76 = por %p74, %p75
      %s78 = sadd.s32 %s77, 1
      %p81 = scmp.eq.s32.totalorder %s22, 1
      %p82 = scmp.ne.s32.totalorder %s77, %s79
      %p83 = scmp.eq.s32.totalorder %s22, 0
      %p84 = por %p82, %p83
      %p85 = scmp.ne.s32.totalorder %s77, %s79
      %p86 = scmp.eq.s32.totalorder %s27, 1
      %p87 = por %p85, %p86
      %p88 = scmp.ne.s32.totalorder %s79, %s80
      %p89 = scmp.eq.s32.totalorder %s27, 0
      %p90 = por %p88, %p89
      %p91 = scmp.ne.s32.totalorder %s79, %s80
      %p92 = scmp.eq.s32.totalorder %s28, 1
      %p93 = por %p91, %p92
      %p95 = scmp.ne.s32.totalorder %s80, %s94
      %p96 = scmp.eq.s32.totalorder %s28, 0
      %p97 = por %p95, %p96
      %s99 = sadd.s32 %s98, 1
      %p102 = scmp.eq.s32.totalorder %s22, 1
      %p103 = scmp.ne.s32.totalorder %s98, %s100
      %p104 = scmp.eq.s32.totalorder %s22, 0
      %p105 = por %p103, %p104
      %p106 = scmp.ne.s32.totalorder %s98, %s100
      %p107 = scmp.eq.s32.totalorder %s27, 1
      %p108 = por %p106, %p107
      %p109 = scmp.ne.s32.totalorder %s100, %s101
      %p110 = scmp.eq.s32.totalorder %s27, 0
      %p111 = por %p109, %p110
      %p112 = scmp.ne.s32.totalorder %s100, %s101
      %p113 = scmp.eq.s32.totalorder %s28, 1
      %p114 = por %p112, %p113
      %p116 = scmp.ne.s32.totalorder %s101, %s115
      %p117 = scmp.eq.s32.totalorder %s28, 0
      %p118 = por %p116, %p117
      %s120 = sadd.s32 %s119, 1
      %p123 = scmp.eq.s32.totalorder %s22, 1
      %p124 = scmp.ne.s32.totalorder %s119, %s121
      %p125 = scmp.eq.s32.totalorder %s22, 0
      %p126 = por %p124, %p125
      %p127 = scmp.ne.s32.totalorder %s119, %s121
      %p128 = scmp.eq.s32.totalorder %s27, 1
      %p129 = por %p127, %p128
      %p130 = scmp.ne.s32.totalorder %s121, %s122
      %p131 = scmp.eq.s32.totalorder %s27, 0
      %p132 = por %p130, %p131
      %p133 = scmp.ne.s32.totalorder %s121, %s122
      %p134 = scmp.eq.s32.totalorder %s28, 1
      %p135 = por %p133, %p134
      %p137 = scmp.ne.s32.totalorder %s122, %s136
      %p138 = scmp.eq.s32.totalorder %s28, 0
      %p139 = por %p137, %p138
      %s141 = sadd.s32 %s140, 1
      %p144 = scmp.eq.s32.totalorder %s22, 1
      %p145 = scmp.ne.s32.totalorder %s140, %s142
      %p146 = scmp.eq.s32.totalorder %s22, 0
      %p147 = por %p145, %p146
      %p148 = scmp.ne.s32.totalorder %s140, %s142
      %p149 = scmp.eq.s32.totalorder %s27, 1
      %p150 = por %p148, %p149
      %p151 = scmp.ne.s32.totalorder %s142, %s143
      %p152 = scmp.eq.s32.totalorder %s27, 0
      %p153 = por %p151, %p152
      %p154 = scmp.ne.s32.totalorder %s142, %s143
      %p155 = scmp.eq.s32.totalorder %s28, 1
      %p156 = por %p154, %p155
      %p158 = scmp.ne.s32.totalorder %s143, %s157
      %p159 = scmp.eq.s32.totalorder %s28, 0
      %p160 = por %p158, %p159
      %s161 = ssub.s32 %s22, %s29
      %p162 = scmp.eq.s32.totalorder %s161, 0
      %s164 = sadd.s32 %s163, 1
      %s165 = scalar_select %p162, %s163, %s164
      %p168 = pneg %p162
      %p169 = scmp.eq.s32.totalorder %s22, 1
      %p170 = por %p168, %p169
      %p171 = scmp.ne.s32.totalorder %s163, %s166
      %p172 = scmp.eq.s32.totalorder %s22, 0
      %p173 = por %p171, %p172
      %p174 = scmp.ne.s32.totalorder %s163, %s166
      %p175 = scmp.eq.s32.totalorder %s27, 1
      %p176 = por %p174, %p175
      %p177 = scmp.ne.s32.totalorder %s166, %s167
      %p178 = scmp.eq.s32.totalorder %s27, 0
      %p179 = por %p177, %p178
      %p180 = scmp.ne.s32.totalorder %s166, %s167
      %p181 = scmp.eq.s32.totalorder %s28, 1
      %p182 = por %p180, %p181
      %p184 = scmp.ne.s32.totalorder %s167, %s183
      %p185 = scmp.eq.s32.totalorder %s28, 0
      %p186 = por %p184, %p185
      %p187 = scmp.le.s32.totalorder 1, %s22
      %p188 = scmp.lt.s32.totalorder %s22, 3
      %p189 = pnand %p187, %p188
      %p190 = pneg %p189
      // Predicated region
      $region9: #{tpu_custom_call.1} parent=5 // pred_check
        _
      $region10: #{tpu_custom_call.1} parent=5 // pred_check_branch
        %192 = sbr.rel (%p189) target = $region12
      $region11: #{tpu_custom_call.1} parent=5 // pred_region
        %s193 = ssub.s32 %s22, 1
        // Predicated region
        $region13: #{tpu_custom_call.1} parent=11 // pred_check
          %p194 = pneg %p69
        $region14: #{tpu_custom_call.1} parent=11 // pred_check_branch
          %196 = sbr.rel (%p194) target = $region16
        $region15: #{tpu_custom_call.1} parent=11 // pred_region
          %198 = vsyncadd [#allocation9], 0
          %s199 = sshll.u32 %s1, 4
          %s200 = int_to_ptr.hbm [resolvable:$true] %s199
          %s201 = sshll.u32 [#allocation8], 4
          %s202 = int_to_ptr.vmem [resolvable:$true] %s201
          %207 = dma.hbm_to_vmem [thread:$0]  %s200, 512, %s202, [#allocation9], 128, 128, 8
        $region16: #{tpu_custom_call.1} parent=11 // pred_fallthru
          _
        // Predicated region
        $region17: #{tpu_custom_call.1} parent=11 // pred_check
          %p208 = pneg %p90
        $region18: #{tpu_custom_call.1} parent=11 // pred_check_branch
          %210 = sbr.rel (%p208) target = $region20
        $region19: #{tpu_custom_call.1} parent=11 // pred_region
          _
        $region20: #{tpu_custom_call.1} parent=11 // pred_fallthru
          _
        // Predicated region
        $region21: #{tpu_custom_call.1} parent=11 // pred_check
          %p211 = pneg %p111
        $region22: #{tpu_custom_call.1} parent=11 // pred_check_branch
          %213 = sbr.rel (%p211) target = $region24
        $region23: #{tpu_custom_call.1} parent=11 // pred_region
          _
        $region24: #{tpu_custom_call.1} parent=11 // pred_fallthru
          _
        // Predicated region
        $region25: #{tpu_custom_call.1} parent=11 // pred_check
          %p214 = pneg %p132
        $region26: #{tpu_custom_call.1} parent=11 // pred_check_branch
          %216 = sbr.rel (%p214) target = $region28
        $region27: #{tpu_custom_call.1} parent=11 // pred_region
          _
        $region28: #{tpu_custom_call.1} parent=11 // pred_fallthru
          _
        // Predicated region
        $region29: #{tpu_custom_call.1} parent=11 // pred_check
          %p217 = pneg %p153
        $region30: #{tpu_custom_call.1} parent=11 // pred_check_branch
          %219 = sbr.rel (%p217) target = $region32
        $region31: #{tpu_custom_call.1} parent=11 // pred_region
          _
        $region32: #{tpu_custom_call.1} parent=11 // pred_fallthru
          _
      $region12: #{tpu_custom_call.1} parent=5 // pred_fallthru
        _
      %p220 = scmp.lt.s32.totalorder %s22, 2
      // Predicated region
      $region33: #{tpu_custom_call.1} parent=5 // pred_check
        %p221 = pneg %p220
      $region34: #{tpu_custom_call.1} parent=5 // pred_check_branch
        %223 = sbr.rel (%p221) target = $region36
      $region35: #{tpu_custom_call.1} parent=5 // pred_region
        // Predicated region
        $region37: #{tpu_custom_call.1} parent=35 // pred_check
          %p224 = pneg %p42
        $region38: #{tpu_custom_call.1} parent=35 // pred_check_branch
          %226 = sbr.rel (%p224) target = $region40
        $region39: #{tpu_custom_call.1} parent=35 // pred_region
          %s227 = sand.u32 %s32, 1
          %s228 = scalar_lea.sflag [#allocation6], %s227
          %s229 = sand.u32 %s32, 1
          %s230 = smul.addr %s229, 8
          %s231 = scalar_lea.vmem [#allocation5], %s230
          %233 = vsyncadd %s228, 0
          %s234 = smul.addr %s22, 8
          %s235 = scalar_lea.hbm %s0, %s234
          %s237 = sshll.u32 %s235, 4
          %s238 = int_to_ptr.hbm [resolvable:$true] %s237
          %s239 = sshll.u32 %s231, 4
          %s240 = int_to_ptr.vmem [resolvable:$true] %s239
          %242 = dma.hbm_to_vmem [thread:$0]  %s238, 128, %s240, %s228
        $region40: #{tpu_custom_call.1} parent=35 // pred_fallthru
          _
      $region36: #{tpu_custom_call.1} parent=5 // pred_fallthru
        _
      %p243 = scmp.le.s32.totalorder 1, %s22
      %p244 = scmp.lt.s32.totalorder %s22, 3
      %p245 = pnand %p243, %p244
      %p246 = pneg %p245
      // Predicated region
      $region41: #{tpu_custom_call.1} parent=5 // pred_check
        _
      $region42: #{tpu_custom_call.1} parent=5 // pred_check_branch
        %248 = sbr.rel (%p245) target = $region44
      $region43: #{tpu_custom_call.1} parent=5 // pred_region
        %s249 = ssub.s32 %s22, 1
        %s250 = sand.u32 %s35, 1
        %s251 = scalar_lea.sflag [#allocation6], %s250
        %s252 = sand.u32 %s35, 1
        %s253 = smul.addr %s252, 8
        %s254 = scalar_lea.vmem [#allocation5], %s253
        // Predicated region
        $region45: #{tpu_custom_call.1} parent=43 // pred_check
          %p255 = pneg %p48
        $region46: #{tpu_custom_call.1} parent=43 // pred_check_branch
          %257 = sbr.rel (%p255) target = $region48
        $region47: #{tpu_custom_call.1} parent=43 // pred_region
          %259 = dma.done %s251, 128
        $region48: #{tpu_custom_call.1} parent=43 // pred_fallthru
          _
        // Predicated region
        $region49: #{tpu_custom_call.1} parent=43 // pred_check
          %p260 = pneg %p69
        $region50: #{tpu_custom_call.1} parent=43 // pred_check_branch
          %262 = sbr.rel (%p260) target = $region52
        $region51: #{tpu_custom_call.1} parent=43 // pred_region
          %264 = dma.done [#allocation9], 512
        $region52: #{tpu_custom_call.1} parent=43 // pred_fallthru
          _
        %s265 = sand.u32 %s35, 1
        %s266 = scalar_lea.sflag [#allocation6], %s265
        %s267 = sand.u32 %s35, 1
        %s268 = smul.addr %s267, 8
        %s269 = scalar_lea.vmem [#allocation5], %s268
        %p270 = pneg %p48
        %p271 = pneg %p45
        %p272 = pneg %p69
        %p273 = pneg %p66
        %p274 = pneg %p90
        %p275 = pneg %p87
        %p276 = pneg %p111
        %p277 = pneg %p108
        %p278 = pneg %p132
        %p279 = pneg %p129
        %p280 = pneg %p153
        %p281 = pneg %p150
        %p282 = pneg %p179
        %p283 = pneg %p176
        %s284 = sand.u32 %s166, 1
        %s285 = scalar_lea.sflag [#allocation7], %s284
        %s286 = sand.u32 %s166, 1
        %s287 = smul.addr %s286, 8
        %s288 = scalar_lea.vmem [#allocation10], %s287
        %v289 = vld [vmem:[%s254] sm:$0xff]
        %vm290 = vcmask 261120
        %v291 = vsel %vm290, %v289, 0.0
        %292 = vadd.xlane.f32.xlu0 %v291
        %v293 = vpop.xlane.xlu0 %292
        %v294 = vrcp.pop 32.0
        %v295 = vmul.f32 32.0, %v294
        %v296 = vsub.f32 1.0, %v295
        %v297 = vmul.f32 %v294, %v296
        %v298 = vadd.f32 %v294, %v297
        %vm299 = vweird.f32 %v294
        %v300 = vsel %vm299, %v294, %v298
        %v301 = vmul.f32 %v293, %v300
        %v302 = vsub.f32 %v289, %v301
        %v303 = vmul.f32 %v302, %v302
        %v304 = vsel %vm290, %v303, 0.0
        %305 = vadd.xlane.f32.xlu0 %v304
        %v306 = vpop.xlane.xlu0 %305
        %v307 = vmul.f32 %v306, 0.032258064
        %v308 = vrsqrt.pop %v307
        %v309 = vmul.f32 %v308, %v307
        %v310 = vmul.f32 %v309, %v308
        %v311 = vmul.f32 0.5, %v310
        %v312 = vsub.f32 1.5, %v311
        %v313 = vmul.f32 %v308, %v312
        %v314 = vmul.f32 %v307, %v313
        %vm315 = vcmp.eq.f32.partialorder %v307, inf
        %v316 = vsel %vm315, %v307, %v314
        %vm317 = vcmp.eq.f32.partialorder %v307, 0.0
        %v318 = vand.u32 %v307, 2147483648
        %v319 = vsel %vm317, %v318, %v316
        %v320 = vadd.f32 %v319, 1e-06
        %v321 = vrcp.pop %v320
        %s322 = sld [smem:[#allocation2]]
        %v323 = vmul.f32 %v302, %v321
        %v324 = vstv %s322
        %v325 = vmul.f32 %v324, %v323
        %s326 = sld [smem:[#allocation3]]
        %v327 = vstv %s326
        %v328 = vadd.f32 %v325, %v327
        %v329 = vld [vmem:[#allocation8] sm:$0xff]
        %v330 = vld [vmem:[#allocation8 + $0x8] sm:$0xff]
        %v331 = vld [vmem:[#allocation8 + $0x10] sm:$0xff]
        %v332 = vld [vmem:[#allocation8 + $0x18] sm:$0xff]
        %v333 = vld [vmem:[%s2] sm:$0x1]
        %v335 = vperm.slane %v333, 0
        %v338 = vsel %vm290, %v328, 0
        %340 = vmatpush.msra.mxu0 0.0
        %341 = vmatpush.msra.mxu0 0.0
        %342 = vmatpush.msra.mxu0 0.0
        %343 = vmatpush.msra.mxu0 0.0
        %344 = vmatpush.msra.mxu0 0.0
        %345 = vmatpush.msra.mxu0 0.0
        %346 = vmatpush.msra.mxu0 0.0
        %347 = vmatpush.msra.mxu0 0.0
        %348 = vmatpush.msra.mxu0 0.0
        %349 = vmatpush.msra.mxu0 0.0
        %350 = vmatpush.msra.mxu0 0.0
        %351 = vmatpush.msra.mxu0 0.0
        %352 = vmatpush.msra.mxu0 %v332
        %353 = vmatpush.msra.mxu0 %v331
        %354 = vmatpush.msra.mxu0 %v330
        %355 = vmatpush.msra.mxu0 %v329
        %356 = vmatmul.f32.gmra.mxu0 %v338
        %v357 = vpop.f32.mrf.mxu0
        %v358 = vadd.f32 %v335, %v357
        %359 = vdwg.mxu0
        %v360 = vadd.f32 %v289, %v358
        %361 = vst.msk [vmem:[%s288] sm:$0xff] %vm290, %v360
        %s362 = sand.u32 %s166, 1
        %s363 = scalar_lea.sflag [#allocation7], %s362
        %s364 = sand.u32 %s166, 1
        %s365 = smul.addr %s364, 8
        %s366 = scalar_lea.vmem [#allocation10], %s365
        // Predicated region
        $region53: #{tpu_custom_call.1} parent=43 // pred_check
          %p367 = pneg %p176
        $region54: #{tpu_custom_call.1} parent=43 // pred_check_branch
          %369 = sbr.rel (%p367) target = $region56
        $region55: #{tpu_custom_call.1} parent=43 // pred_region
          %371 = vsyncadd %s363, 0
          %s372 = smul.addr %s27, 8
          %s373 = scalar_lea.hbm %s6, %s372
          %s375 = sshll.u32 %s366, 4
          %s376 = int_to_ptr.vmem [resolvable:$true] %s375
          %s377 = sshll.u32 %s373, 4
          %s378 = int_to_ptr.hbm [resolvable:$true] %s377
          %380 = dma.vmem_to_hbm [thread:$0]  %s376, 128, %s378, %s363
        $region56: #{tpu_custom_call.1} parent=43 // pred_fallthru
          _
      $region44: #{tpu_custom_call.1} parent=5 // pred_fallthru
        _
      %p381 = scmp.le.s32.totalorder 2, %s22
      // Predicated region
      $region57: #{tpu_custom_call.1} parent=5 // pred_check
        %p382 = pneg %p381
      $region58: #{tpu_custom_call.1} parent=5 // pred_check_branch
        %384 = sbr.rel (%p382) target = $region60
      $region59: #{tpu_custom_call.1} parent=5 // pred_region
        %s385 = ssub.s32 %s22, 2
        // Predicated region
        $region61: #{tpu_custom_call.1} parent=59 // pred_check
          %p386 = pneg %p182
        $region62: #{tpu_custom_call.1} parent=59 // pred_check_branch
          %388 = sbr.rel (%p386) target = $region64
        $region63: #{tpu_custom_call.1} parent=59 // pred_region
          %s389 = sand.u32 %s167, 1
          %s390 = scalar_lea.sflag [#allocation7], %s389
          %s391 = sand.u32 %s167, 1
          %s392 = smul.addr %s391, 8
          %s393 = scalar_lea.vmem [#allocation10], %s392
          %395 = dma.done %s390, 128
        $region64: #{tpu_custom_call.1} parent=59 // pred_fallthru
          _
      $region60: #{tpu_custom_call.1} parent=5 // pred_fallthru
        _
    $region6: #{tpu_custom_call.1} parent=1 // loop_footer
      %s26 = sadd.s32 1, %s22
    $region7: #{tpu_custom_call.1} parent=1 // loop_footer_branch
      %21 = sbr.rel target = $region3
    $region8: #{tpu_custom_call.1} parent=1 // loop_exit
      _
    %396 = vsyncpa [#allocation6], 1
    %s397 = scalar_lea.sflag [#allocation6], 1
    %398 = vsyncpa %s397, 1
    %399 = vsyncpa [#allocation9], 1
    %400 = vsyncpa [#allocation7], 1
    %s401 = scalar_lea.sflag [#allocation7], 1
    %402 = vsyncpa %s401, 1

</llo_original>
